<compile_context>
chip_gen: v6e
topology: v6e:2x2x1
jax: 0.10.0
libtpu: 0.0.40
codegen_flags: <defaults>
</compile_context>

<pallas_src>
import jax
import jax.numpy as jnp
from jax.experimental import pallas as pl
from jax.experimental.pallas import tpu as pltpu

BN_EPS = 1e-5


def head_kernel(x_ref, w_ref, gamma_ref, beta_ref, o_ref, acc_ref):
    # x_ref:     (B, tk)   flattened activation slab (K-slice)
    # w_ref:     (tk, tn)  W^T tile
    # gamma_ref: (1, tn)   BN weight tile
    # beta_ref:  (1, tn)   BN bias tile
    # o_ref:     (B, tn)   output tile
    # acc_ref:   (B, tn)   f32 accumulator (persists across the K axis)
    k = pl.program_id(1)

    @pl.when(k == 0)
    def _():
        acc_ref[...] = jnp.zeros_like(acc_ref)

    acc_ref[...] += jnp.dot(
        x_ref[...], w_ref[...], preferred_element_type=jnp.float32
    )

    @pl.when(k == pl.num_programs(1) - 1)
    def _():
        z = acc_ref[...]
        # BatchNorm1d, training-mode semantics: biased variance over batch.
        mean = jnp.mean(z, axis=0, keepdims=True)
        centered = z - mean
        var = jnp.mean(centered * centered, axis=0, keepdims=True)
        # Fold gamma * rsqrt(var+eps) into one (1, tn) scale row.
        scale = gamma_ref[...] * jax.lax.rsqrt(var + BN_EPS)
        o_ref[...] = (centered * scale + beta_ref[...]).astype(o_ref.dtype)


def _pick_tile(dim, target):
    """Largest lane-aligned (multiple-of-128) divisor of `dim` that is <= target,
    falling back to the whole dim for small / non-aligned sizes."""
    if dim <= target:
        return dim
    t = (target // 128) * 128
    while t >= 128:
        if dim % t == 0:
            return t
        t -= 128
    return dim


def head_forward(x_nchw, w_t, gamma, beta, *, tk=1024, tn=512):
    """x_nchw: (B, C, H, W); w_t: (K, N) pre-transposed Linear weight (W^T);
    gamma, beta: (N,) BatchNorm affine params."""
    B, C, H, W = x_nchw.shape
    K = C * H * W
    N = w_t.shape[1]
    assert w_t.shape == (K, N)

    # Row-major flatten matches torch nn.Flatten on NCHW exactly.
    x_flat = x_nchw.reshape(B, K)
    g2 = gamma.reshape(1, N)
    be2 = beta.reshape(1, N)

    tk = _pick_tile(K, tk)
    tn = _pick_tile(N, tn)
    assert K % tk == 0 and N % tn == 0
    grid = (N // tn, K // tk)  # (parallel N tiles, K reduction last)

    return pl.pallas_call(
        head_kernel,
        out_shape=jax.ShapeDtypeStruct((B, N), jnp.float32),
        grid_spec=pltpu.PrefetchScalarGridSpec(
            num_scalar_prefetch=0,
            grid=grid,
            in_specs=[
                pl.BlockSpec((B, tk), lambda j, k: (0, k)),   # x: stream K slices
                pl.BlockSpec((tk, tn), lambda j, k: (k, j)),  # W^T: stream tiles
                pl.BlockSpec((1, tn), lambda j, k: (0, j)),   # gamma
                pl.BlockSpec((1, tn), lambda j, k: (0, j)),   # beta
            ],
            out_specs=pl.BlockSpec((B, tn), lambda j, k: (0, j)),
            scratch_shapes=[pltpu.VMEM((B, tn), jnp.float32)],
        ),
        compiler_params=pltpu.CompilerParams(
            dimension_semantics=("parallel", "arbitrary"),
        ),
    )(x_flat, w_t, g2, be2)


def init_params(key, inplanes, feat_size, emb_size):
    """Deterministic synthetic init mirroring init_weight():
       Linear: xavier_normal_ weight (bias=0, dropped — cancels under train-mode BN);
       BN: weight=1, bias=0.  The (N,K) torch weight is transposed ONCE here so the
       forward path never pays a per-call HBM transpose."""
    K = inplanes * feat_size * feat_size
    N = emb_size
    std = (2.0 / (K + N)) ** 0.5  # xavier normal
    w = jax.random.normal(key, (N, K), dtype=jnp.float32) * std
    w_t = jnp.asarray(w.T)  # (K, N), hoisted out of the forward path
    gamma = jnp.ones((N,), dtype=jnp.float32)
    beta = jnp.zeros((N,), dtype=jnp.float32)
    return w_t, gamma, beta


if __name__ == "__main__":
    # Small shapes consistent with the module's forward:
    # batch=8, inplanes(C)=32, feat_size(H=W)=4 -> K = 32*4*4 = 512, emb_size=256.
    # tk=256 / tn=128 at these shapes exercises the multi-tile accumulate path.
    B, C, F, EMB = 8, 32, 4, 256

    key = jax.random.PRNGKey(0)
    kx, kw = jax.random.split(key)
    x = jax.random.normal(kx, (B, C, F, F), dtype=jnp.float32)
    w_t, gamma, beta = init_params(kw, inplanes=C, feat_size=F, emb_size=EMB)

    out = head_forward(x, w_t, gamma, beta, tk=256, tn=128)
    out = jax.block_until_ready(out)

    # Sanity check against a pure-JAX reference of the same semantics
    # (Linear bias is zero-init and cancels under training-mode BN).
    z_ref = x.reshape(B, -1) @ w_t
    m = z_ref.mean(axis=0, keepdims=True)
    v = ((z_ref - m) ** 2).mean(axis=0, keepdims=True)
    ref = gamma * (z_ref - m) / jnp.sqrt(v + BN_EPS) + beta
    assert out.shape == (B, EMB)
    assert jnp.allclose(out, ref, atol=1e-4, rtol=1e-4)

    print("KERNEL_OK")
</pallas_src>

<mosaic_0001>
module attributes {stable_mosaic.version = 11 : i64} {
  func.func @head_kernel(%arg0: i32, %arg1: i32, %arg2: memref<8x256xf32, #tpu.memory_space<vmem>>, %arg3: memref<256x128xf32, #tpu.memory_space<vmem>>, %arg4: memref<1x128xf32, #tpu.memory_space<vmem>>, %arg5: memref<1x128xf32, #tpu.memory_space<vmem>>, %arg6: memref<8x128xf32, #tpu.memory_space<vmem>>, %arg7: memref<8x128xf32, #tpu.memory_space<vmem>>) attributes {dimension_semantics = [#tpu.dimension_semantics<parallel>, #tpu.dimension_semantics<arbitrary>], iteration_bounds = array<i64: 2, 2>, scalar_prefetch = 0 : i64, scratch_operands = 1 : i64, tpu.core_type = #tpu.core_type<tc>, window_params = [{transform_indices = @transform_0, window_bounds = array<i64: 8, 256>}, {transform_indices = @transform_1, window_bounds = array<i64: 256, 128>}, {transform_indices = @transform_2, window_bounds = array<i64: 1, 128>}, {transform_indices = @transform_3, window_bounds = array<i64: 1, 128>}, {transform_indices = @transform_4, window_bounds = array<i64: 8, 128>}]} {
    %c0_i32 = arith.constant 0 : i32
    %0 = arith.cmpi eq, %arg1, %c0_i32 : i32
    %1 = arith.extui %0 : i1 to i32
    %c0_i32_0 = arith.constant 0 : i32
    %2 = arith.cmpi ne, %1, %c0_i32_0 : i32
    scf.if %2 {
      %cst_9 = arith.constant 0.000000e+00 : f32
      %12 = vector.broadcast %cst_9 : f32 to vector<8x128xf32>
      %c0_10 = arith.constant 0 : index
      %c0_11 = arith.constant 0 : index
      %13 = vector.load %arg7[%c0_10, %c0_11] : memref<8x128xf32, #tpu.memory_space<vmem>>, vector<8x128xf32>
      tpu.vector_store %arg7[%c0_10, %c0_11], %12 {strides = array<i32>} : memref<8x128xf32, #tpu.memory_space<vmem>>, vector<8x128xf32>,
    } else {
    }
    %c0 = arith.constant 0 : index
    %c0_1 = arith.constant 0 : index
    %3 = vector.load %arg7[%c0, %c0_1] : memref<8x128xf32, #tpu.memory_space<vmem>>, vector<8x128xf32>
    %c0_2 = arith.constant 0 : index
    %c0_3 = arith.constant 0 : index
    %4 = vector.load %arg2[%c0_2, %c0_3] : memref<8x256xf32, #tpu.memory_space<vmem>>, vector<8x256xf32>
    %c0_4 = arith.constant 0 : index
    %c0_5 = arith.constant 0 : index
    %5 = vector.load %arg3[%c0_4, %c0_5] : memref<256x128xf32, #tpu.memory_space<vmem>>, vector<256x128xf32>
    %cst = arith.constant dense<0.000000e+00> : vector<8x128xf32>
    %6 = tpu.matmul %4, %5, %cst {dimension_numbers = #tpu.dot_dimension_numbers<[1], [0], [0], [1], [0, 0, 1, 1], [], []>} : vector<8x256xf32>, vector<256x128xf32>, vector<8x128xf32> -> vector<8x128xf32>
    %7 = arith.addf %3, %6 : vector<8x128xf32>
    %c0_6 = arith.constant 0 : index
    %c0_7 = arith.constant 0 : index
    %8 = vector.load %arg7[%c0_6, %c0_7] : memref<8x128xf32, #tpu.memory_space<vmem>>, vector<8x128xf32>
    tpu.vector_store %arg7[%c0_6, %c0_7], %7 {strides = array<i32>} : memref<8x128xf32, #tpu.memory_space<vmem>>, vector<8x128xf32>,
    %c1_i32 = arith.constant 1 : i32
    %9 = arith.cmpi eq, %arg1, %c1_i32 : i32
    %10 = arith.extui %9 : i1 to i32
    %c0_i32_8 = arith.constant 0 : i32
    %11 = arith.cmpi ne, %10, %c0_i32_8 : i32
    scf.if %11 {
      %c0_9 = arith.constant 0 : index
      %c0_10 = arith.constant 0 : index
      %12 = vector.load %arg7[%c0_9, %c0_10] : memref<8x128xf32, #tpu.memory_space<vmem>>, vector<8x128xf32>
      %cst_11 = arith.constant dense<0.000000e+00> : vector<128xf32>
      %13 = vector.multi_reduction <add>, %12, %cst_11 [0] : vector<8x128xf32> to vector<128xf32>
      %14 = vector.shape_cast %13 : vector<128xf32> to vector<1x128xf32>
      %cst_12 = arith.constant 8.000000e+00 : f32
      %15 = vector.broadcast %cst_12 : f32 to vector<1x128xf32>
      %16 = arith.divf %14, %15 : vector<1x128xf32>
      %17 = vector.broadcast %16 : vector<1x128xf32> to vector<8x128xf32>
      %18 = arith.subf %12, %17 : vector<8x128xf32>
      %19 = arith.mulf %18, %18 : vector<8x128xf32>
      %cst_13 = arith.constant dense<0.000000e+00> : vector<128xf32>
      %20 = vector.multi_reduction <add>, %19, %cst_13 [0] : vector<8x128xf32> to vector<128xf32>
      %21 = vector.shape_cast %20 : vector<128xf32> to vector<1x128xf32>
      %cst_14 = arith.constant 8.000000e+00 : f32
      %22 = vector.broadcast %cst_14 : f32 to vector<1x128xf32>
      %23 = arith.divf %21, %22 : vector<1x128xf32>
      %c0_15 = arith.constant 0 : index
      %c0_16 = arith.constant 0 : index
      %24 = vector.load %arg4[%c0_15, %c0_16] : memref<1x128xf32, #tpu.memory_space<vmem>>, vector<1x128xf32>
      %cst_17 = arith.constant 9.99999974E-6 : f32
      %25 = vector.broadcast %cst_17 : f32 to vector<1x128xf32>
      %26 = arith.addf %23, %25 : vector<1x128xf32>
      %27 = math.rsqrt %26 : vector<1x128xf32>
      %28 = arith.mulf %24, %27 : vector<1x128xf32>
      %29 = vector.broadcast %28 : vector<1x128xf32> to vector<8x128xf32>
      %30 = arith.mulf %18, %29 : vector<8x128xf32>
      %c0_18 = arith.constant 0 : index
      %c0_19 = arith.constant 0 : index
      %31 = vector.load %arg5[%c0_18, %c0_19] : memref<1x128xf32, #tpu.memory_space<vmem>>, vector<1x128xf32>
      %32 = vector.broadcast %31 : vector<1x128xf32> to vector<8x128xf32>
      %33 = arith.addf %30, %32 : vector<8x128xf32>
      %c0_20 = arith.constant 0 : index
      %c0_21 = arith.constant 0 : index
      %34 = vector.load %arg6[%c0_20, %c0_21] : memref<8x128xf32, #tpu.memory_space<vmem>>, vector<8x128xf32>
      tpu.vector_store %arg6[%c0_20, %c0_21], %33 {strides = array<i32>} : memref<8x128xf32, #tpu.memory_space<vmem>>, vector<8x128xf32>,
    } else {
    }
    return
  }
  func.func @transform_0(%arg0: i32, %arg1: i32) -> (i32, i32) {
    %c0_i32 = arith.constant 0 : i32
    %c0_i32_0 = arith.constant 0 : i32
    return %c0_i32, %arg1 : i32, i32
  }
  func.func @transform_1(%arg0: i32, %arg1: i32) -> (i32, i32) {
    %c0_i32 = arith.constant 0 : i32
    return %arg1, %arg0 : i32, i32
  }
  func.func @transform_2(%arg0: i32, %arg1: i32) -> (i32, i32) {
    %c0_i32 = arith.constant 0 : i32
    %c0_i32_0 = arith.constant 0 : i32
    return %c0_i32, %arg0 : i32, i32
  }
  func.func @transform_3(%arg0: i32, %arg1: i32) -> (i32, i32) {
    %c0_i32 = arith.constant 0 : i32
    %c0_i32_0 = arith.constant 0 : i32
    return %c0_i32, %arg0 : i32, i32
  }
  func.func @transform_4(%arg0: i32, %arg1: i32) -> (i32, i32) {
    %c0_i32 = arith.constant 0 : i32
    %c0_i32_0 = arith.constant 0 : i32
    return %c0_i32, %arg0 : i32, i32
  }
}

</mosaic_0001>

<llo_original>
// kernel: tpu_custom_call.1
$region0: #{tpu_custom_call.1}
  #allocation0 [shape = 'u32[]', space=smem, size = 0x4, offset = 0x4, fixed_abs, tag = 'smem constant byte address 0x4 - core index']
  #allocation1 [shape = 'u32[144,128]{1,0:T(1,128)}', space=vmem, size = 0x12000, scoped, tag = 'internal scratch']
  #allocation2 [shape = 'f32[8,128]{1,0:T(8,128)}', space=vmem, size = 0x1000, scoped, tag = 'scratch operand']
  %s0 = inlined_call_operand.hbm [shape: f32[8,512], index: 0, kind: input, shape index: {}]
  %s1 = inlined_call_operand.hbm [shape: f32[512,256], index: 1, kind: input, shape index: {}]
  %s2 = inlined_call_operand.vmem [shape: f32[1,256], index: 2, kind: input, shape index: {}]
  %s3 = inlined_call_operand.vmem [shape: f32[1,256], index: 3, kind: input, shape index: {}]
  %s4 = inlined_call_operand.hbm [shape: f32[8,256], index: 4, kind: output, shape index: {}]
  %s5 = sld [smem:[#allocation0]]
  $region65: #{tpu_custom_call.1} parent=0
    _
  %s7 = ssub.s32 1, %s5
  %s8 = scalar_select 0, %s7, %s5
  $region1: #{tpu_custom_call.1} parent=0
    #allocation3 [shape = 'u8[16384]{0}', space=vmem, size = 0x4000, scoped, tag = 'input window, operand 0']
    #allocation4 [shape = 's32[2]{0}', space=sflag, size = 0x8, scoped, tag = 'scoped memory for tpu_custom_call.1']
    #allocation5 [shape = 's32[2]{0}', space=sflag, size = 0x8, scoped, tag = 'scoped memory for tpu_custom_call.1']
    #allocation6 [shape = 'u8[262144]{0}', space=vmem, size = 0x40000, scoped, tag = 'input window, operand 1']
    #allocation7 [shape = 's32[2]{0}', space=sflag, size = 0x8, scoped, tag = 'scoped memory for tpu_custom_call.1']
    #allocation8 [shape = 'u8[8192]{0}', space=vmem, size = 0x2000, scoped, tag = 'output window, operand 0']
    %9 = vsyncpa [#allocation4], 0
    %s10 = scalar_lea.sflag [#allocation4], 1
    %11 = vsyncpa %s10, 0
    %12 = vsyncpa [#allocation7], 0
    %s13 = scalar_lea.sflag [#allocation7], 1
    %14 = vsyncpa %s13, 0
    %15 = vsyncpa [#allocation5], 0
    %s16 = scalar_lea.sflag [#allocation5], 1
    %17 = vsyncpa %s16, 0
    loop: start=0, step=1, limit=6
    $region2: #{tpu_custom_call.1} parent=1 // loop_pre_header
      _
    $region3: #{tpu_custom_call.1} parent=1 // loop_header
      %s19 = sphi 0, %s23
      %p20 = scmp.ge.s32.totalorder %s19, 6
      %s26 = sphi 0, %s38
      %s27 = sphi 0, %s34
      %s28 = sphi 0, %s26
      %s29 = sphi 0, %s27
      %s30 = sphi 0, %s28
      %s31 = sphi 0, %s29
      %s41 = sphi 0, %s43
      %s44 = sphi 0, %s41
      %s45 = sphi 0, %s44
      %s61 = sphi 0, %s45
      %s69 = sphi 0, %s71
      %s72 = sphi 0, %s69
      %s73 = sphi 0, %s72
      %s89 = sphi 0, %s73
      %s95 = sphi 0, %s97
      %s98 = sphi 0, %s95
      %s99 = sphi 0, %s98
      %s115 = sphi 0, %s99
      %s121 = sphi 0, %s123
      %s124 = sphi 0, %s121
      %s125 = sphi 0, %s124
      %s141 = sphi 0, %s125
      %s147 = sphi 0, %s149
      %s150 = sphi 0, %s147
      %s151 = sphi 0, %s150
      %s167 = sphi 0, %s151
    $region4: #{tpu_custom_call.1} parent=1 // loop_header_branch
      %22 = sbr.rel (%p20) target = $region8
    $region5: #{tpu_custom_call.1} parent=1 // loop_body
      %s24 = ssub.s32 %s19, 1
      %s25 = ssub.s32 %s19, 2
      %s32 = sadd.s32 1, %s27
      %p33 = scmp.ge.s32.totalorder %s32, 2
      %s34 = scalar_select %p33, 0, %s32
      %s35 = sadd.s32 1, %s26
      %s36 = scalar_select %p33, %s35, %s26
      %p37 = scmp.ge.s32.totalorder %s36, 2
      %s38 = scalar_select %p37, 0, %s36
      %s39 = ssub.s32 %s27, %s34
      %p40 = scmp.eq.s32.totalorder %s39, 0
      %s42 = sadd.s32 %s41, 1
      %s43 = scalar_select %p40, %s41, %s42
      %p46 = pneg %p40
      %p47 = scmp.eq.s32.totalorder %s19, 3
      %p48 = por %p46, %p47
      %p49 = scmp.ne.s32.totalorder %s41, %s44
      %p50 = scmp.eq.s32.totalorder %s19, 0
      %p51 = por %p49, %p50
      %p52 = scmp.ne.s32.totalorder %s41, %s44
      %p53 = scmp.eq.s32.totalorder %s24, 3
      %p54 = por %p52, %p53
      %p55 = scmp.ne.s32.totalorder %s44, %s45
      %p56 = scmp.eq.s32.totalorder %s24, 0
      %p57 = por %p55, %p56
      %p58 = scmp.ne.s32.totalorder %s44, %s45
      %p59 = scmp.eq.s32.totalorder %s25, 3
      %p60 = por %p58, %p59
      %p62 = scmp.ne.s32.totalorder %s45, %s61
      %p63 = scmp.eq.s32.totalorder %s25, 0
      %p64 = por %p62, %p63
      %s65 = ssub.s32 %s27, %s34
      %s66 = ssub.s32 %s26, %s38
      %s67 = sor.u32 %s65, %s66
      %p68 = scmp.eq.s32.totalorder %s67, 0
      %s70 = sadd.s32 %s69, 1
      %s71 = scalar_select %p68, %s69, %s70
      %p74 = pneg %p68
      %p75 = scmp.eq.s32.totalorder %s19, 3
      %p76 = por %p74, %p75
      %p77 = scmp.ne.s32.totalorder %s69, %s72
      %p78 = scmp.eq.s32.totalorder %s19, 0
      %p79 = por %p77, %p78
      %p80 = scmp.ne.s32.totalorder %s69, %s72
      %p81 = scmp.eq.s32.totalorder %s24, 3
      %p82 = por %p80, %p81
      %p83 = scmp.ne.s32.totalorder %s72, %s73
      %p84 = scmp.eq.s32.totalorder %s24, 0
      %p85 = por %p83, %p84
      %p86 = scmp.ne.s32.totalorder %s72, %s73
      %p87 = scmp.eq.s32.totalorder %s25, 3
      %p88 = por %p86, %p87
      %p90 = scmp.ne.s32.totalorder %s73, %s89
      %p91 = scmp.eq.s32.totalorder %s25, 0
      %p92 = por %p90, %p91
      %s93 = ssub.s32 %s26, %s38
      %p94 = scmp.eq.s32.totalorder %s93, 0
      %s96 = sadd.s32 %s95, 1
      %s97 = scalar_select %p94, %s95, %s96
      %p100 = pneg %p94
      %p101 = scmp.eq.s32.totalorder %s19, 3
      %p102 = por %p100, %p101
      %p103 = scmp.ne.s32.totalorder %s95, %s98
      %p104 = scmp.eq.s32.totalorder %s19, 0
      %p105 = por %p103, %p104
      %p106 = scmp.ne.s32.totalorder %s95, %s98
      %p107 = scmp.eq.s32.totalorder %s24, 3
      %p108 = por %p106, %p107
      %p109 = scmp.ne.s32.totalorder %s98, %s99
      %p110 = scmp.eq.s32.totalorder %s24, 0
      %p111 = por %p109, %p110
      %p112 = scmp.ne.s32.totalorder %s98, %s99
      %p113 = scmp.eq.s32.totalorder %s25, 3
      %p114 = por %p112, %p113
      %p116 = scmp.ne.s32.totalorder %s99, %s115
      %p117 = scmp.eq.s32.totalorder %s25, 0
      %p118 = por %p116, %p117
      %s119 = ssub.s32 %s26, %s38
      %p120 = scmp.eq.s32.totalorder %s119, 0
      %s122 = sadd.s32 %s121, 1
      %s123 = scalar_select %p120, %s121, %s122
      %p126 = pneg %p120
      %p127 = scmp.eq.s32.totalorder %s19, 3
      %p128 = por %p126, %p127
      %p129 = scmp.ne.s32.totalorder %s121, %s124
      %p130 = scmp.eq.s32.totalorder %s19, 0
      %p131 = por %p129, %p130
      %p132 = scmp.ne.s32.totalorder %s121, %s124
      %p133 = scmp.eq.s32.totalorder %s24, 3
      %p134 = por %p132, %p133
      %p135 = scmp.ne.s32.totalorder %s124, %s125
      %p136 = scmp.eq.s32.totalorder %s24, 0
      %p137 = por %p135, %p136
      %p138 = scmp.ne.s32.totalorder %s124, %s125
      %p139 = scmp.eq.s32.totalorder %s25, 3
      %p140 = por %p138, %p139
      %p142 = scmp.ne.s32.totalorder %s125, %s141
      %p143 = scmp.eq.s32.totalorder %s25, 0
      %p144 = por %p142, %p143
      %s145 = ssub.s32 %s26, %s38
      %p146 = scmp.eq.s32.totalorder %s145, 0
      %s148 = sadd.s32 %s147, 1
      %s149 = scalar_select %p146, %s147, %s148
      %p152 = pneg %p146
      %p153 = scmp.eq.s32.totalorder %s19, 3
      %p154 = por %p152, %p153
      %p155 = scmp.ne.s32.totalorder %s147, %s150
      %p156 = scmp.eq.s32.totalorder %s19, 0
      %p157 = por %p155, %p156
      %p158 = scmp.ne.s32.totalorder %s147, %s150
      %p159 = scmp.eq.s32.totalorder %s24, 3
      %p160 = por %p158, %p159
      %p161 = scmp.ne.s32.totalorder %s150, %s151
      %p162 = scmp.eq.s32.totalorder %s24, 0
      %p163 = por %p161, %p162
      %p164 = scmp.ne.s32.totalorder %s150, %s151
      %p165 = scmp.eq.s32.totalorder %s25, 3
      %p166 = por %p164, %p165
      %p168 = scmp.ne.s32.totalorder %s151, %s167
      %p169 = scmp.eq.s32.totalorder %s25, 0
      %p170 = por %p168, %p169
      %p171 = scmp.le.s32.totalorder 1, %s19
      %p172 = scmp.lt.s32.totalorder %s19, 5
      %p173 = pnand %p171, %p172
      %p174 = pneg %p173
      // Predicated region
      $region9: #{tpu_custom_call.1} parent=5 // pred_check
        _
      $region10: #{tpu_custom_call.1} parent=5 // pred_check_branch
        %176 = sbr.rel (%p173) target = $region12
      $region11: #{tpu_custom_call.1} parent=5 // pred_region
        %s177 = ssub.s32 %s19, 1
      $region12: #{tpu_custom_call.1} parent=5 // pred_fallthru
        _
      %p178 = scmp.lt.s32.totalorder %s19, 4
      // Predicated region
      $region13: #{tpu_custom_call.1} parent=5 // pred_check
        %p179 = pneg %p178
      $region14: #{tpu_custom_call.1} parent=5 // pred_check_branch
        %181 = sbr.rel (%p179) target = $region16
      $region15: #{tpu_custom_call.1} parent=5 // pred_region
        // Predicated region
        $region17: #{tpu_custom_call.1} parent=15 // pred_check
          %p182 = pneg %p51
        $region18: #{tpu_custom_call.1} parent=15 // pred_check_branch
          %184 = sbr.rel (%p182) target = $region20
        $region19: #{tpu_custom_call.1} parent=15 // pred_region
          %s185 = sand.u32 %s41, 1
          %s186 = scalar_lea.sflag [#allocation4], %s185
          %s187 = sand.u32 %s41, 1
          %s188 = smul.addr %s187, 16
          %s189 = scalar_lea.vmem [#allocation3], %s188
          %s190 = smul.u32 2, %s27
          %s192 = ssub.s32 256, 256
          %193 = vsyncadd %s186, %s192
          %s194 = smul.addr %s190, 128
          %s195 = scalar_lea.hbm %s0, %s194
          %s197 = sshll.u32 %s189, 4
          %s198 = int_to_ptr.vmem [resolvable:$true] %s197
          %200 = dma.hbm_to_vmem [thread:$0]  %s195, 256, %s198, %s186
        $region20: #{tpu_custom_call.1} parent=15 // pred_fallthru
          _
        // Predicated region
        $region21: #{tpu_custom_call.1} parent=15 // pred_check
          %p201 = pneg %p79
        $region22: #{tpu_custom_call.1} parent=15 // pred_check_branch
          %203 = sbr.rel (%p201) target = $region24
        $region23: #{tpu_custom_call.1} parent=15 // pred_region
          %s204 = sand.u32 %s69, 1
          %s205 = scalar_lea.sflag [#allocation7], %s204
          %s206 = sand.u32 %s69, 1
          %s207 = smul.addr %s206, 256
          %s208 = scalar_lea.vmem [#allocation6], %s207
          %s209 = smul.u32 32, %s27
          %s211 = ssub.s32 4096, 4096
          %212 = vsyncadd %s205, %s211
          %s213 = smul.addr %s209, 2
          %s214 = sadd.s32 %s26, %s213
          %s215 = smul.addr %s214, 128
          %s216 = scalar_lea.hbm %s1, %s215
          %s217 = sshll.u32 %s208, 4
          %s218 = int_to_ptr.vmem [resolvable:$true] %s217
          %223 = dma.hbm_to_vmem [thread:$0]  %s216, 4096, %s218, %s205, 256, 128, 8
        $region24: #{tpu_custom_call.1} parent=15 // pred_fallthru
          _
        // Predicated region
        $region25: #{tpu_custom_call.1} parent=15 // pred_check
          %p224 = pneg %p105
        $region26: #{tpu_custom_call.1} parent=15 // pred_check_branch
          %226 = sbr.rel (%p224) target = $region28
        $region27: #{tpu_custom_call.1} parent=15 // pred_region
          %p227 = scmp.lt.s32.totalorder %s26, 1
          %s228 = scalar_select %p227, %s26, 1
          %s229 = scalar_lea.vmem %s2, %s228
        $region28: #{tpu_custom_call.1} parent=15 // pred_fallthru
          _
        // Predicated region
        $region29: #{tpu_custom_call.1} parent=15 // pred_check
          %p230 = pneg %p131
        $region30: #{tpu_custom_call.1} parent=15 // pred_check_branch
          %232 = sbr.rel (%p230) target = $region32
        $region31: #{tpu_custom_call.1} parent=15 // pred_region
          %p233 = scmp.lt.s32.totalorder %s26, 1
          %s234 = scalar_select %p233, %s26, 1
          %s235 = scalar_lea.vmem %s3, %s234
        $region32: #{tpu_custom_call.1} parent=15 // pred_fallthru
          _
      $region16: #{tpu_custom_call.1} parent=5 // pred_fallthru
        _
      %p236 = scmp.le.s32.totalorder 1, %s19
      %p237 = scmp.lt.s32.totalorder %s19, 5
      %p238 = pnand %p236, %p237
      %p239 = pneg %p238
      // Predicated region
      $region33: #{tpu_custom_call.1} parent=5 // pred_check
        _
      $region34: #{tpu_custom_call.1} parent=5 // pred_check_branch
        %241 = sbr.rel (%p238) target = $region36
      $region35: #{tpu_custom_call.1} parent=5 // pred_region
        %s242 = ssub.s32 %s19, 1
        %s243 = sand.u32 %s44, 1
        %s244 = scalar_lea.sflag [#allocation4], %s243
        %s245 = sand.u32 %s44, 1
        %s246 = smul.addr %s245, 16
        %s247 = scalar_lea.vmem [#allocation3], %s246
        // Predicated region
        $region37: #{tpu_custom_call.1} parent=35 // pred_check
          %p248 = pneg %p57
        $region38: #{tpu_custom_call.1} parent=35 // pred_check_branch
          %250 = sbr.rel (%p248) target = $region40
        $region39: #{tpu_custom_call.1} parent=35 // pred_region
          %251 = dma.done %s244, 256
        $region40: #{tpu_custom_call.1} parent=35 // pred_fallthru
          _
        %s252 = sand.u32 %s72, 1
        %s253 = scalar_lea.sflag [#allocation7], %s252
        %s254 = sand.u32 %s72, 1
        %s255 = smul.addr %s254, 256
        %s256 = scalar_lea.vmem [#allocation6], %s255
        // Predicated region
        $region41: #{tpu_custom_call.1} parent=35 // pred_check
          %p257 = pneg %p85
        $region42: #{tpu_custom_call.1} parent=35 // pred_check_branch
          %259 = sbr.rel (%p257) target = $region44
        $region43: #{tpu_custom_call.1} parent=35 // pred_region
          %260 = dma.done %s253, 4096
        $region44: #{tpu_custom_call.1} parent=35 // pred_fallthru
          _
        %s261 = sand.u32 %s44, 1
        %s262 = scalar_lea.sflag [#allocation4], %s261
        %s263 = sand.u32 %s44, 1
        %s264 = smul.addr %s263, 16
        %s265 = scalar_lea.vmem [#allocation3], %s264
        %p266 = pneg %p57
        %p267 = pneg %p54
        %s268 = sand.u32 %s72, 1
        %s269 = scalar_lea.sflag [#allocation7], %s268
        %s270 = sand.u32 %s72, 1
        %s271 = smul.addr %s270, 256
        %s272 = scalar_lea.vmem [#allocation6], %s271
        %p273 = pneg %p85
        %p274 = pneg %p82
        %p275 = scmp.lt.s32.totalorder %s28, 1
        %s276 = scalar_select %p275, %s28, 1
        %s277 = scalar_lea.vmem %s2, %s276
        %p278 = pneg %p111
        %p279 = pneg %p108
        %p280 = scmp.lt.s32.totalorder %s28, 1
        %s281 = scalar_select %p280, %s28, 1
        %s282 = scalar_lea.vmem %s3, %s281
        %p283 = pneg %p137
        %p284 = pneg %p134
        %p285 = pneg %p163
        %p286 = pneg %p160
        %s287 = sand.u32 %s150, 1
        %s288 = scalar_lea.sflag [#allocation5], %s287
        %s289 = sand.u32 %s150, 1
        %s290 = smul.addr %s289, 8
        %s291 = scalar_lea.vmem [#allocation8], %s290
        %s292 = smul.u32 2, %s29
        %s293 = smul.u32 32, %s29
        %p294 = scmp.lt.s32.totalorder %s28, 1
        %s295 = scalar_select %p294, %s28, 1
        %s296 = scalar_lea.vmem %s2, %s295
        %p297 = scmp.lt.s32.totalorder %s28, 1
        %s298 = scalar_select %p297, %s28, 1
        %s299 = scalar_lea.vmem %s3, %s298
        %p300 = scmp.eq.s32.totalorder %s29, 0
        // Predicated region
        $region45: #{tpu_custom_call.1} parent=35 // pred_check
          %p301 = pneg %p300
        $region46: #{tpu_custom_call.1} parent=35 // pred_check_branch
          %303 = sbr.rel (%p301) target = $region48
        $region47: #{tpu_custom_call.1} parent=35 // pred_region
          %304 = vst [vmem:[#allocation2] sm:$0xff] 0.0
        $region48: #{tpu_custom_call.1} parent=35 // pred_fallthru
          _
        %v305 = vld [vmem:[#allocation2] sm:$0xff]
        %v306 = vld [vmem:[%s247] sm:$0xff]
        %v307 = vld [vmem:[%s247 + $0x8] sm:$0xff]
        %v308 = vld [vmem:[%s256] sm:$0xff]
        %v309 = vld [vmem:[%s256 + $0x8] sm:$0xff]
        %v310 = vld [vmem:[%s256 + $0x10] sm:$0xff]
        %v311 = vld [vmem:[%s256 + $0x18] sm:$0xff]
        %v312 = vld [vmem:[%s256 + $0x20] sm:$0xff]
        %v313 = vld [vmem:[%s256 + $0x28] sm:$0xff]
        %v314 = vld [vmem:[%s256 + $0x30] sm:$0xff]
        %v315 = vld [vmem:[%s256 + $0x38] sm:$0xff]
        %v316 = vld [vmem:[%s256 + $0x40] sm:$0xff]
        %v317 = vld [vmem:[%s256 + $0x48] sm:$0xff]
        %v318 = vld [vmem:[%s256 + $0x50] sm:$0xff]
        %v319 = vld [vmem:[%s256 + $0x58] sm:$0xff]
        %v320 = vld [vmem:[%s256 + $0x60] sm:$0xff]
        %v321 = vld [vmem:[%s256 + $0x68] sm:$0xff]
        %v322 = vld [vmem:[%s256 + $0x70] sm:$0xff]
        %v323 = vld [vmem:[%s256 + $0x78] sm:$0xff]
        %v324 = vld [vmem:[%s256 + $0x80] sm:$0xff]
        %v325 = vld [vmem:[%s256 + $0x88] sm:$0xff]
        %v326 = vld [vmem:[%s256 + $0x90] sm:$0xff]
        %v327 = vld [vmem:[%s256 + $0x98] sm:$0xff]
        %v328 = vld [vmem:[%s256 + $0xa0] sm:$0xff]
        %v329 = vld [vmem:[%s256 + $0xa8] sm:$0xff]
        %v330 = vld [vmem:[%s256 + $0xb0] sm:$0xff]
        %v331 = vld [vmem:[%s256 + $0xb8] sm:$0xff]
        %v332 = vld [vmem:[%s256 + $0xc0] sm:$0xff]
        %v333 = vld [vmem:[%s256 + $0xc8] sm:$0xff]
        %v334 = vld [vmem:[%s256 + $0xd0] sm:$0xff]
        %v335 = vld [vmem:[%s256 + $0xd8] sm:$0xff]
        %v336 = vld [vmem:[%s256 + $0xe0] sm:$0xff]
        %v337 = vld [vmem:[%s256 + $0xe8] sm:$0xff]
        %v338 = vld [vmem:[%s256 + $0xf0] sm:$0xff]
        %v339 = vld [vmem:[%s256 + $0xf8] sm:$0xff]
        %340 = vmatprep.subr.mxu0 0.0
        %341 = vmatpush1.msra.mxu0 %v323
        %342 = vmatprep.subr.mxu0 0.0
        %343 = vmatpush1.msra.mxu0 %v322
        %344 = vmatprep.subr.mxu0 0.0
        %345 = vmatpush1.msra.mxu0 %v321
        %346 = vmatprep.subr.mxu0 0.0
        %347 = vmatpush1.msra.mxu0 %v320
        %348 = vmatprep.subr.mxu0 0.0
        %349 = vmatpush1.msra.mxu0 %v319
        %350 = vmatprep.subr.mxu0 0.0
        %351 = vmatpush1.msra.mxu0 %v318
        %352 = vmatprep.subr.mxu0 0.0
        %353 = vmatpush1.msra.mxu0 %v317
        %354 = vmatprep.subr.mxu0 0.0
        %355 = vmatpush1.msra.mxu0 %v316
        %356 = vmatprep.subr.mxu0 0.0
        %357 = vmatpush1.msra.mxu0 %v315
        %358 = vmatprep.subr.mxu0 0.0
        %359 = vmatpush1.msra.mxu0 %v314
        %360 = vmatprep.subr.mxu0 0.0
        %361 = vmatpush1.msra.mxu0 %v313
        %362 = vmatprep.subr.mxu0 0.0
        %363 = vmatpush1.msra.mxu0 %v312
        %364 = vmatprep.subr.mxu0 0.0
        %365 = vmatpush1.msra.mxu0 %v311
        %366 = vmatprep.subr.mxu0 0.0
        %367 = vmatpush1.msra.mxu0 %v310
        %368 = vmatprep.subr.mxu0 0.0
        %369 = vmatpush1.msra.mxu0 %v309
        %370 = vmatprep.subr.mxu0 0.0
        %371 = vmatpush1.msra.mxu0 %v308
        %372 = vmatprep.subr.mxu0 0.0
        %373 = vmatpush2.msra.mxu0 %v339
        %374 = vmatprep.subr.mxu0 0.0
        %375 = vmatpush2.msra.mxu0 %v338
        %376 = vmatprep.subr.mxu0 0.0
        %377 = vmatpush2.msra.mxu0 %v337
        %378 = vmatprep.subr.mxu0 0.0
        %379 = vmatpush2.msra.mxu0 %v336
        %380 = vmatprep.subr.mxu0 0.0
        %381 = vmatpush2.msra.mxu0 %v335
        %382 = vmatprep.subr.mxu0 0.0
        %383 = vmatpush2.msra.mxu0 %v334
        %384 = vmatprep.subr.mxu0 0.0
        %385 = vmatpush2.msra.mxu0 %v333
        %386 = vmatprep.subr.mxu0 0.0
        %387 = vmatpush2.msra.mxu0 %v332
        %388 = vmatprep.subr.mxu0 0.0
        %389 = vmatpush2.msra.mxu0 %v331
        %390 = vmatprep.subr.mxu0 0.0
        %391 = vmatpush2.msra.mxu0 %v330
        %392 = vmatprep.subr.mxu0 0.0
        %393 = vmatpush2.msra.mxu0 %v329
        %394 = vmatprep.subr.mxu0 0.0
        %395 = vmatpush2.msra.mxu0 %v328
        %396 = vmatprep.subr.mxu0 0.0
        %397 = vmatpush2.msra.mxu0 %v327
        %398 = vmatprep.subr.mxu0 0.0
        %399 = vmatpush2.msra.mxu0 %v326
        %400 = vmatprep.subr.mxu0 0.0
        %401 = vmatpush2.msra.mxu0 %v325
        %402 = vmatprep.subr.mxu0 0.0
        %403 = vmatpush2.msra.mxu0 %v324
        %404 = vmatprep.mubr.f32.mxu0 %v307
        %405 = vmatmul.mubr.f32.gmra.mxu0 %v306
        %v406 = vpop.f32.mrf.mxu0
        %v407 = vadd.f32 0.0, %v406
        %v408 = vpop.f32.mrf.mxu0
        %409 = vdwg.mxu0
        %v410 = vadd.f32 %v305, %v407
        %411 = vst [vmem:[#allocation2] sm:$0xff] %v410
        %p412 = scmp.eq.s32.totalorder %s29, 1
        // Predicated region
        $region49: #{tpu_custom_call.1} parent=35 // pred_check
          %p413 = pneg %p412
        $region50: #{tpu_custom_call.1} parent=35 // pred_check_branch
          %415 = sbr.rel (%p413) target = $region52
        $region51: #{tpu_custom_call.1} parent=35 // pred_region
          %v416 = vld [vmem:[#allocation2] sm:$0xff]
          %v417 = vrot.slane %v416, 4
          %v418 = vadd.f32 %v416, %v417
          %v419 = vrot.slane %v418, 2
          %v420 = vadd.f32 %v418, %v419
          %v421 = vrot.slane %v420, 1
          %v422 = vadd.f32 %v420, %v421
          %v423 = vrcp.pop 8.0
          %v424 = vmul.f32 %v422, %v423
          %v425 = vsub.f32 %v416, %v424
          %v426 = vmul.f32 %v425, %v425
          %v427 = vrot.slane %v426, 4
          %v428 = vadd.f32 %v426, %v427
          %v429 = vrot.slane %v428, 2
          %v430 = vadd.f32 %v428, %v429
          %v431 = vrot.slane %v430, 1
          %v432 = vadd.f32 %v430, %v431
          %v433 = vmul.f32 %v432, %v423
          %v434 = vld [vmem:[%s296] sm:$0x1]
          %v435 = vadd.f32 %v433, 1e-05
          %v436 = vrsqrt.pop %v435
          %v437 = vmul.f32 %v434, %v436
          %v439 = vlaneseq
          %v440 = vshrl.u32 %v439, 7
          %v441 = vsub.s32 0, %v440
          %v442 = vrot.slane %v437, %v441
          %v444 = vmul.f32 %v425, %v442
          %v445 = vld [vmem:[%s299] sm:$0x1]
          %v447 = vlaneseq
          %v448 = vshrl.u32 %v447, 7
          %v449 = vsub.s32 0, %v448
          %v450 = vrot.slane %v445, %v449
          %v452 = vadd.f32 %v444, %v450
          %453 = vst [vmem:[%s291] sm:$0xff] %v452
        $region52: #{tpu_custom_call.1} parent=35 // pred_fallthru
          _
        %s454 = sand.u32 %s150, 1
        %s455 = scalar_lea.sflag [#allocation5], %s454
        %s456 = sand.u32 %s150, 1
        %s457 = smul.addr %s456, 8
        %s458 = scalar_lea.vmem [#allocation8], %s457
        // Predicated region
        $region53: #{tpu_custom_call.1} parent=35 // pred_check
          %p459 = pneg %p160
        $region54: #{tpu_custom_call.1} parent=35 // pred_check_branch
          %461 = sbr.rel (%p459) target = $region56
        $region55: #{tpu_custom_call.1} parent=35 // pred_region
          %s463 = ssub.s32 128, 128
          %464 = vsyncadd %s455, %s463
          %s465 = smul.addr %s28, 128
          %s466 = scalar_lea.hbm %s4, %s465
          %s468 = sshll.u32 %s458, 4
          %s469 = int_to_ptr.vmem [resolvable:$true] %s468
          %471 = dma.vmem_to_hbm [thread:$0]  %s469, 128, %s466, %s455
        $region56: #{tpu_custom_call.1} parent=35 // pred_fallthru
          _
      $region36: #{tpu_custom_call.1} parent=5 // pred_fallthru
        _
      %p472 = scmp.le.s32.totalorder 2, %s19
      // Predicated region
      $region57: #{tpu_custom_call.1} parent=5 // pred_check
        %p473 = pneg %p472
      $region58: #{tpu_custom_call.1} parent=5 // pred_check_branch
        %475 = sbr.rel (%p473) target = $region60
      $region59: #{tpu_custom_call.1} parent=5 // pred_region
        %s476 = ssub.s32 %s19, 2
        // Predicated region
        $region61: #{tpu_custom_call.1} parent=59 // pred_check
          %p477 = pneg %p166
        $region62: #{tpu_custom_call.1} parent=59 // pred_check_branch
          %479 = sbr.rel (%p477) target = $region64
        $region63: #{tpu_custom_call.1} parent=59 // pred_region
          %s480 = sand.u32 %s151, 1
          %s481 = scalar_lea.sflag [#allocation5], %s480
          %s482 = sand.u32 %s151, 1
          %s483 = smul.addr %s482, 8
          %s484 = scalar_lea.vmem [#allocation8], %s483
          %485 = dma.done %s481, 128
        $region64: #{tpu_custom_call.1} parent=59 // pred_fallthru
          _
      $region60: #{tpu_custom_call.1} parent=5 // pred_fallthru
        _
    $region6: #{tpu_custom_call.1} parent=1 // loop_footer
      %s23 = sadd.s32 1, %s19
    $region7: #{tpu_custom_call.1} parent=1 // loop_footer_branch
      %18 = sbr.rel target = $region3
    $region8: #{tpu_custom_call.1} parent=1 // loop_exit
      _
    %486 = vsyncpa [#allocation4], 1
    %s487 = scalar_lea.sflag [#allocation4], 1
    %488 = vsyncpa %s487, 1
    %489 = vsyncpa [#allocation7], 1
    %s490 = scalar_lea.sflag [#allocation7], 1
    %491 = vsyncpa %s490, 1
    %492 = vsyncpa [#allocation5], 1
    %s493 = scalar_lea.sflag [#allocation5], 1
    %494 = vsyncpa %s493, 1

</llo_original>
